<compile_context>
chip_gen: v6e
topology: v6e:2x2x1
jax: 0.10.0
libtpu: 0.0.40
codegen_flags: <defaults>
</compile_context>

<pallas_src>
import jax
import jax.numpy as jnp
from jax.experimental import pallas as pl
from jax.experimental.pallas import tpu as pltpu


_VMEM_LIMIT_BYTES = 48 * 1024 * 1024  # safe on v7x (64 MiB physical), plenty on v5e/v6e


# ---------------------------------------------------------------------------
# Pallas kernels
# ---------------------------------------------------------------------------
def gcn_hidden_kernel(adj_ref, xw_ref, scale_ref, shift_ref, o_ref, acc_ref):
    # adj_ref : (TN, TK) bf16 tile of normalized adjacency
    # xw_ref  : (TK, Cout) bf16 tile of X @ W
    # scale/shift: (1, Cout) f32  (BatchNorm(eval) + conv bias folded)
    # acc_ref : (TN, Cout) f32 VMEM accumulator
    k = pl.program_id(1)

    @pl.when(k == 0)
    def _():
        acc_ref[...] = jnp.zeros_like(acc_ref)

    acc_ref[...] += jnp.dot(adj_ref[...], xw_ref[...],
                            preferred_element_type=jnp.float32)

    @pl.when(k == pl.num_programs(1) - 1)
    def _():
        h = acc_ref[...] * scale_ref[...] + shift_ref[...]
        o_ref[...] = jnp.maximum(h, 0.0)            # ReLU (dropout = identity in eval)


def gcn_final_kernel(adj_ref, xw_ref, b_ref, o_ref, acc_ref):
    k = pl.program_id(1)

    @pl.when(k == 0)
    def _():
        acc_ref[...] = jnp.zeros_like(acc_ref)

    acc_ref[...] += jnp.dot(adj_ref[...], xw_ref[...],
                            preferred_element_type=jnp.float32)

    @pl.when(k == pl.num_programs(1) - 1)
    def _():
        h = acc_ref[...] + b_ref[...]
        m = jnp.max(h, axis=-1, keepdims=True)
        z = h - m
        lse = jnp.log(jnp.sum(jnp.exp(z), axis=-1, keepdims=True))
        o_ref[...] = z - lse                        # log_softmax over classes


# ---------------------------------------------------------------------------
# pallas_call wrappers
# ---------------------------------------------------------------------------
def _pick_tile(n, target, align):
    """Largest tile <= target that divides n and is a multiple of `align`,
    else fall back to the full dimension (always legal)."""
    if n <= target or n <= align:
        return n
    t = (min(target, n) // align) * align
    while t >= align:
        if n % t == 0:
            return t
        t -= align
    return n


def _gcn_layer_call(kernel, adj_bf16, xw_bf16, epilogue_vecs, cout):
    n = adj_bf16.shape[0]
    tn = _pick_tile(n, 256, 8)      # row tile (sublane-aligned)
    tk = _pick_tile(n, 2048, 128)   # K tile over adjacency columns (lane-aligned)
    grid = (n // tn, n // tk)

    in_specs = [
        pl.BlockSpec((tn, tk), lambda i, k: (i, k)),       # adjacency stream
        pl.BlockSpec((tk, cout), lambda i, k: (k, 0)),     # XW stream
    ] + [pl.BlockSpec((1, cout), lambda i, k: (0, 0)) for _ in epilogue_vecs]

    return pl.pallas_call(
        kernel,
        out_shape=jax.ShapeDtypeStruct((n, cout), jnp.float32),
        grid=grid,
        in_specs=in_specs,
        out_specs=pl.BlockSpec((tn, cout), lambda i, k: (i, 0)),
        scratch_shapes=[pltpu.VMEM((tn, cout), jnp.float32)],
        compiler_params=pltpu.CompilerParams(
            dimension_semantics=("parallel", "arbitrary"),
            vmem_limit_bytes=_VMEM_LIMIT_BYTES,
        ),
    )(adj_bf16, xw_bf16, *epilogue_vecs)


@jax.jit
def gcn_hidden_layer(adj_bf16, x, w, scale, shift):
    # Precompute the tiny XW matmul in f32, stream it to the kernel in bf16.
    xw = jnp.dot(x.astype(jnp.float32), w,
                 preferred_element_type=jnp.float32).astype(jnp.bfloat16)
    return _gcn_layer_call(gcn_hidden_kernel, adj_bf16, xw, (scale, shift), w.shape[1])


@jax.jit
def gcn_final_layer(adj_bf16, x, w, b):
    xw = jnp.dot(x.astype(jnp.float32), w,
                 preferred_element_type=jnp.float32).astype(jnp.bfloat16)
    return _gcn_layer_call(gcn_final_kernel, adj_bf16, xw, (b,), w.shape[1])


# ---------------------------------------------------------------------------
# Parameter init (deterministic, mirrors GCNConv glorot + zero bias, BN defaults)
# ---------------------------------------------------------------------------
def init_gcn_params(key, in_channels, hidden_channels, out_channels, num_layers):
    dims = [in_channels] + [hidden_channels] * (num_layers - 1) + [out_channels]
    convs, bns = [], []
    for li in range(num_layers):
        cin, cout = dims[li], dims[li + 1]
        key, sub = jax.random.split(key)
        bound = jnp.sqrt(6.0 / (cin + cout))            # glorot uniform
        w = jax.random.uniform(sub, (cin, cout), jnp.float32, -bound, bound)
        b = jnp.zeros((cout,), jnp.float32)
        convs.append((w, b))
        if li < num_layers - 1:
            bns.append(dict(gamma=jnp.ones((cout,), jnp.float32),
                            beta=jnp.zeros((cout,), jnp.float32),
                            mean=jnp.zeros((cout,), jnp.float32),
                            var=jnp.ones((cout,), jnp.float32)))
    return convs, bns


def gcn_forward(x, adj, convs, bns, eps=1e-5):
    adj_bf16 = adj.astype(jnp.bfloat16)                  # cast the big stream once
    for i in range(len(convs) - 1):
        w, b = convs[i]
        bn = bns[i]
        scale = bn["gamma"] / jnp.sqrt(bn["var"] + eps)
        shift = bn["beta"] + (b - bn["mean"]) * scale    # conv bias folded into BN shift
        x = gcn_hidden_layer(adj_bf16, x, w,
                             scale.reshape(1, -1), shift.reshape(1, -1))
    w, b = convs[-1]
    return gcn_final_layer(adj_bf16, x, w, b.reshape(1, -1))


def gcn_reference(x, adj, convs, bns, eps=1e-5):
    h = x
    for i in range(len(convs) - 1):
        w, b = convs[i]
        bn = bns[i]
        h = adj @ (h @ w) + b
        h = (h - bn["mean"]) / jnp.sqrt(bn["var"] + eps) * bn["gamma"] + bn["beta"]
        h = jnp.maximum(h, 0.0)
    w, b = convs[-1]
    h = adj @ (h @ w) + b
    return jax.nn.log_softmax(h, axis=-1)


def build_normalized_adj(key, n, p=0.15):
    # random symmetric graph + self loops, symmetric normalization D^-1/2 (A+I) D^-1/2
    a = (jax.random.uniform(key, (n, n)) < p).astype(jnp.float32)
    a = jnp.maximum(a, a.T)
    a = a.at[jnp.arange(n), jnp.arange(n)].set(0.0)
    a = a + jnp.eye(n, dtype=jnp.float32)
    deg = jnp.sum(a, axis=1)
    dinv = 1.0 / jnp.sqrt(deg)
    return a * dinv[:, None] * dinv[None, :]


if __name__ == "__main__":
    N = 64              # number of graph nodes
    IN_C, HID_C, OUT_C = 16, 32, 8
    NUM_LAYERS = 3

    key = jax.random.PRNGKey(0)
    k_x, k_adj, k_p = jax.random.split(key, 3)

    x = jax.random.normal(k_x, (N, IN_C), jnp.float32)
    adj = build_normalized_adj(k_adj, N)
    convs, bns = init_gcn_params(k_p, IN_C, HID_C, OUT_C, NUM_LAYERS)

    out = gcn_forward(x, adj, convs, bns)
    out = jax.block_until_ready(out)

    assert out.shape == (N, OUT_C)
    # rows of log_softmax output must exp-sum to 1 (softmax computed in f32 in-kernel)
    assert jnp.allclose(jnp.sum(jnp.exp(out), axis=-1), 1.0, atol=1e-4)
    # compare against f32 pure-JAX reference (tolerance accounts for bf16 streams)
    ref = gcn_reference(x, adj, convs, bns)
    assert jnp.allclose(out, ref, atol=0.2), float(jnp.max(jnp.abs(out - ref)))
    print("KERNEL_OK")
</pallas_src>

<mosaic_0001>
module attributes {stable_mosaic.version = 11 : i64} {
  func.func @gcn_hidden_kernel(%arg0: i32, %arg1: i32, %arg2: memref<64x64xbf16, #tpu.memory_space<vmem>>, %arg3: memref<64x32xbf16, #tpu.memory_space<vmem>>, %arg4: memref<1x32xf32, #tpu.memory_space<vmem>>, %arg5: memref<1x32xf32, #tpu.memory_space<vmem>>, %arg6: memref<64x32xf32, #tpu.memory_space<vmem>>, %arg7: memref<64x32xf32, #tpu.memory_space<vmem>>) attributes {dimension_semantics = [#tpu.dimension_semantics<parallel>, #tpu.dimension_semantics<arbitrary>], iteration_bounds = array<i64: 1, 1>, scalar_prefetch = 0 : i64, scratch_operands = 1 : i64, tpu.core_type = #tpu.core_type<tc>, window_params = [{transform_indices = @transform_0, window_bounds = array<i64: 64, 64>}, {transform_indices = @transform_1, window_bounds = array<i64: 64, 32>}, {pipeline_mode = #tpu.pipeline_mode<synchronous>, transform_indices = @transform_2, window_bounds = array<i64: 1, 32>}, {pipeline_mode = #tpu.pipeline_mode<synchronous>, transform_indices = @transform_3, window_bounds = array<i64: 1, 32>}, {transform_indices = @transform_4, window_bounds = array<i64: 64, 32>}]} {
    %c0_i32 = arith.constant 0 : i32
    %0 = arith.cmpi eq, %arg1, %c0_i32 : i32
    %1 = arith.extui %0 : i1 to i32
    %c0_i32_0 = arith.constant 0 : i32
    %2 = arith.cmpi ne, %1, %c0_i32_0 : i32
    scf.if %2 {
      %cst_10 = arith.constant 0.000000e+00 : f32
      %12 = vector.broadcast %cst_10 : f32 to vector<64x32xf32>
      %c0_11 = arith.constant 0 : index
      %c0_12 = arith.constant 0 : index
      %13 = vector.load %arg7[%c0_11, %c0_12] : memref<64x32xf32, #tpu.memory_space<vmem>>, vector<64x32xf32>
      tpu.vector_store %arg7[%c0_11, %c0_12], %12 {strides = array<i32>} : memref<64x32xf32, #tpu.memory_space<vmem>>, vector<64x32xf32>,
    } else {
    }
    %c0 = arith.constant 0 : index
    %c0_1 = arith.constant 0 : index
    %3 = vector.load %arg7[%c0, %c0_1] : memref<64x32xf32, #tpu.memory_space<vmem>>, vector<64x32xf32>
    %c0_2 = arith.constant 0 : index
    %c0_3 = arith.constant 0 : index
    %4 = vector.load %arg2[%c0_2, %c0_3] : memref<64x64xbf16, #tpu.memory_space<vmem>>, vector<64x64xbf16>
    %c0_4 = arith.constant 0 : index
    %c0_5 = arith.constant 0 : index
    %5 = vector.load %arg3[%c0_4, %c0_5] : memref<64x32xbf16, #tpu.memory_space<vmem>>, vector<64x32xbf16>
    %cst = arith.constant dense<0.000000e+00> : vector<64x32xf32>
    %6 = tpu.matmul %4, %5, %cst {dimension_numbers = #tpu.dot_dimension_numbers<[1], [0], [0], [1], [0, 0, 1, 1], [], []>} : vector<64x64xbf16>, vector<64x32xbf16>, vector<64x32xf32> -> vector<64x32xf32>
    %7 = arith.addf %3, %6 : vector<64x32xf32>
    %c0_6 = arith.constant 0 : index
    %c0_7 = arith.constant 0 : index
    %8 = vector.load %arg7[%c0_6, %c0_7] : memref<64x32xf32, #tpu.memory_space<vmem>>, vector<64x32xf32>
    tpu.vector_store %arg7[%c0_6, %c0_7], %7 {strides = array<i32>} : memref<64x32xf32, #tpu.memory_space<vmem>>, vector<64x32xf32>,
    %c0_i32_8 = arith.constant 0 : i32
    %9 = arith.cmpi eq, %arg1, %c0_i32_8 : i32
    %10 = arith.extui %9 : i1 to i32
    %c0_i32_9 = arith.constant 0 : i32
    %11 = arith.cmpi ne, %10, %c0_i32_9 : i32
    scf.if %11 {
      %c0_10 = arith.constant 0 : index
      %c0_11 = arith.constant 0 : index
      %12 = vector.load %arg7[%c0_10, %c0_11] : memref<64x32xf32, #tpu.memory_space<vmem>>, vector<64x32xf32>
      %c0_12 = arith.constant 0 : index
      %c0_13 = arith.constant 0 : index
      %13 = vector.load %arg4[%c0_12, %c0_13] : memref<1x32xf32, #tpu.memory_space<vmem>>, vector<1x32xf32>
      %14 = vector.broadcast %13 : vector<1x32xf32> to vector<64x32xf32>
      %15 = arith.mulf %12, %14 : vector<64x32xf32>
      %c0_14 = arith.constant 0 : index
      %c0_15 = arith.constant 0 : index
      %16 = vector.load %arg5[%c0_14, %c0_15] : memref<1x32xf32, #tpu.memory_space<vmem>>, vector<1x32xf32>
      %17 = vector.broadcast %16 : vector<1x32xf32> to vector<64x32xf32>
      %18 = arith.addf %15, %17 : vector<64x32xf32>
      %cst_16 = arith.constant 0.000000e+00 : f32
      %19 = vector.broadcast %cst_16 : f32 to vector<64x32xf32>
      %20 = arith.maximumf %18, %19 : vector<64x32xf32>
      %c0_17 = arith.constant 0 : index
      %c0_18 = arith.constant 0 : index
      %21 = vector.load %arg6[%c0_17, %c0_18] : memref<64x32xf32, #tpu.memory_space<vmem>>, vector<64x32xf32>
      tpu.vector_store %arg6[%c0_17, %c0_18], %20 {strides = array<i32>} : memref<64x32xf32, #tpu.memory_space<vmem>>, vector<64x32xf32>,
    } else {
    }
    return
  }
  func.func @transform_0(%arg0: i32, %arg1: i32) -> (i32, i32) {
    %c0_i32 = arith.constant 0 : i32
    return %arg0, %arg1 : i32, i32
  }
  func.func @transform_1(%arg0: i32, %arg1: i32) -> (i32, i32) {
    %c0_i32 = arith.constant 0 : i32
    %c0_i32_0 = arith.constant 0 : i32
    return %arg1, %c0_i32 : i32, i32
  }
  func.func @transform_2(%arg0: i32, %arg1: i32) -> (i32, i32) {
    %c0_i32 = arith.constant 0 : i32
    %c0_i32_0 = arith.constant 0 : i32
    %c0_i32_1 = arith.constant 0 : i32
    return %c0_i32, %c0_i32_0 : i32, i32
  }
  func.func @transform_3(%arg0: i32, %arg1: i32) -> (i32, i32) {
    %c0_i32 = arith.constant 0 : i32
    %c0_i32_0 = arith.constant 0 : i32
    %c0_i32_1 = arith.constant 0 : i32
    return %c0_i32, %c0_i32_0 : i32, i32
  }
  func.func @transform_4(%arg0: i32, %arg1: i32) -> (i32, i32) {
    %c0_i32 = arith.constant 0 : i32
    %c0_i32_0 = arith.constant 0 : i32
    return %arg0, %c0_i32 : i32, i32
  }
}

</mosaic_0001>

<llo_original>
// kernel: gcn_hidden_layer.1
$region0: #{gcn_hidden_layer.1}
  #allocation0 [shape = 'u32[]', space=smem, size = 0x4, offset = 0x4, fixed_abs, tag = 'smem constant byte address 0x4 - core index']
  #allocation1 [shape = 'u32[144,128]{1,0:T(1,128)}', space=vmem, size = 0x12000, scoped, tag = 'internal scratch']
  #allocation2 [shape = 'f32[64,32]{1,0:T(8,128)}', space=vmem, size = 0x8000, scoped, tag = 'scratch operand']
  %s0 = inlined_call_operand.vmem [shape: bf16[64,64], index: 0, kind: input, shape index: {}]
  %s1 = inlined_call_operand.vmem [shape: bf16[64,32], index: 1, kind: input, shape index: {}]
  %s2 = inlined_call_operand.vmem [shape: f32[1,32], index: 2, kind: input, shape index: {}]
  %s3 = inlined_call_operand.vmem [shape: f32[1,32], index: 3, kind: input, shape index: {}]
  %s4 = inlined_call_operand.vmem [shape: f32[64,32], index: 4, kind: output, shape index: {}]
  %s5 = sld [smem:[#allocation0]]
  $region34: #{gcn_hidden_layer.1} parent=0
    _
  %s7 = ssub.s32 1, %s5
  %s8 = scalar_select 0, %s7, %s5
  // Predicated region
  $region2: #{gcn_hidden_layer.1} parent=0 // pred_check
    _
  $region3: #{gcn_hidden_layer.1} parent=0 // pred_check_branch
    %10 = sbr.rel (0) target = $region5
  $region4: #{gcn_hidden_layer.1} parent=0 // pred_region
    _
  $region5: #{gcn_hidden_layer.1} parent=0 // pred_fallthru
    _
  // Predicated region
  $region6: #{gcn_hidden_layer.1} parent=0 // pred_check
    _
  $region7: #{gcn_hidden_layer.1} parent=0 // pred_check_branch
    %12 = sbr.rel (0) target = $region9
  $region8: #{gcn_hidden_layer.1} parent=0 // pred_region
    _
  $region9: #{gcn_hidden_layer.1} parent=0 // pred_fallthru
    _
  // Predicated region
  $region10: #{gcn_hidden_layer.1} parent=0 // pred_check
    _
  $region11: #{gcn_hidden_layer.1} parent=0 // pred_check_branch
    %14 = sbr.rel (0) target = $region13
  $region12: #{gcn_hidden_layer.1} parent=0 // pred_region
    _
  $region13: #{gcn_hidden_layer.1} parent=0 // pred_fallthru
    _
  // Predicated region
  $region14: #{gcn_hidden_layer.1} parent=0 // pred_check
    _
  $region15: #{gcn_hidden_layer.1} parent=0 // pred_check_branch
    %16 = sbr.rel (0) target = $region17
  $region16: #{gcn_hidden_layer.1} parent=0 // pred_region
    _
  $region17: #{gcn_hidden_layer.1} parent=0 // pred_fallthru
    _
  %p18 = scmp.eq.s32.totalorder 0, 0
  // Predicated region
  $region18: #{gcn_hidden_layer.1} parent=0 // pred_check
    %p19 = pneg %p18
  $region19: #{gcn_hidden_layer.1} parent=0 // pred_check_branch
    %21 = sbr.rel (%p19) target = $region21
  $region20: #{gcn_hidden_layer.1} parent=0 // pred_region
    %vm22 = vcmask 261120
    %23 = vst.msk [vmem:[#allocation2] sm:$0xff] %vm22, 0.0
    %24 = vst.msk [vmem:[#allocation2 + $0x8] sm:$0xff] %vm22, 0.0
    %25 = vst.msk [vmem:[#allocation2 + $0x10] sm:$0xff] %vm22, 0.0
    %26 = vst.msk [vmem:[#allocation2 + $0x18] sm:$0xff] %vm22, 0.0
    %27 = vst.msk [vmem:[#allocation2 + $0x20] sm:$0xff] %vm22, 0.0
    %28 = vst.msk [vmem:[#allocation2 + $0x28] sm:$0xff] %vm22, 0.0
    %29 = vst.msk [vmem:[#allocation2 + $0x30] sm:$0xff] %vm22, 0.0
    %30 = vst.msk [vmem:[#allocation2 + $0x38] sm:$0xff] %vm22, 0.0
  $region21: #{gcn_hidden_layer.1} parent=0 // pred_fallthru
    _
  %v31 = vld [vmem:[#allocation2] sm:$0xff]
  %v32 = vld [vmem:[#allocation2 + $0x8] sm:$0xff]
  %v33 = vld [vmem:[#allocation2 + $0x10] sm:$0xff]
  %v34 = vld [vmem:[#allocation2 + $0x18] sm:$0xff]
  %v35 = vld [vmem:[#allocation2 + $0x20] sm:$0xff]
  %v36 = vld [vmem:[#allocation2 + $0x28] sm:$0xff]
  %v37 = vld [vmem:[#allocation2 + $0x30] sm:$0xff]
  %v38 = vld [vmem:[#allocation2 + $0x38] sm:$0xff]
  %v39 = vld [vmem:[%s0] sm:$0xf]
  %v40 = vld [vmem:[%s0 + $0x4] sm:$0xf]
  %v41 = vld [vmem:[%s0 + $0x8] sm:$0xf]
  %v42 = vld [vmem:[%s0 + $0xc] sm:$0xf]
  %v43 = vld [vmem:[%s0 + $0x10] sm:$0xf]
  %v44 = vld [vmem:[%s0 + $0x14] sm:$0xf]
  %v45 = vld [vmem:[%s0 + $0x18] sm:$0xf]
  %v46 = vld [vmem:[%s0 + $0x1c] sm:$0xf]
  %v47 = vld [vmem:[%s1] sm:$0xf]
  %v48 = vld [vmem:[%s1 + $0x4] sm:$0xf]
  %v49 = vld [vmem:[%s1 + $0x8] sm:$0xf]
  %v50 = vld [vmem:[%s1 + $0xc] sm:$0xf]
  %v51 = vld [vmem:[%s1 + $0x10] sm:$0xf]
  %v52 = vld [vmem:[%s1 + $0x14] sm:$0xf]
  %v53 = vld [vmem:[%s1 + $0x18] sm:$0xf]
  %v54 = vld [vmem:[%s1 + $0x1c] sm:$0xf]
  %v63 = vunpack.c.l.b16 %v39
  %v64 = vunpack.c.l.b16 %v40
  %v65 = vunpack.c.l.b16 %v41
  %v66 = vunpack.c.l.b16 %v42
  %v67 = vunpack.c.l.b16 %v43
  %v68 = vunpack.c.l.b16 %v44
  %v69 = vunpack.c.l.b16 %v45
  %v70 = vunpack.c.l.b16 %v46
  %v71 = vpack.c.b16 %v64, %v63
  %v72 = vpack.c.b16 %v66, %v65
  %v73 = vpack.c.b16 %v68, %v67
  %v74 = vpack.c.b16 %v70, %v69
  %v83 = vunpack.c.l.b16 %v47
  %v84 = vunpack.c.l.b16 %v48
  %v85 = vunpack.c.l.b16 %v49
  %v86 = vunpack.c.l.b16 %v50
  %v87 = vunpack.c.l.b16 %v51
  %v88 = vunpack.c.l.b16 %v52
  %v89 = vunpack.c.l.b16 %v53
  %v90 = vunpack.c.l.b16 %v54
  %v91 = vpack.c.b16 %v84, %v83
  %v92 = vpack.c.b16 %v86, %v85
  %v93 = vpack.c.b16 %v88, %v87
  %v94 = vpack.c.b16 %v90, %v89
  %vm99 = vcmask 523264
  %v101 = vsel %vm99, %v71, 0
  %v104 = vsel %vm99, %v72, 0
  %v107 = vsel %vm99, %v73, 0
  %v110 = vsel %vm99, %v74, 0
  %112 = vmatprep.subr.bf16.mxu0 0
  %113 = vmatpush1.bf16.msra.mxu0 0
  %114 = vmatprep.subr.bf16.mxu0 0
  %115 = vmatpush1.bf16.msra.mxu0 0
  %116 = vmatprep.subr.bf16.mxu0 0
  %117 = vmatpush1.bf16.msra.mxu0 0
  %118 = vmatprep.subr.bf16.mxu0 0
  %119 = vmatpush1.bf16.msra.mxu0 0
  %120 = vmatprep.subr.bf16.mxu0 0
  %121 = vmatpush1.bf16.msra.mxu0 %v94
  %122 = vmatprep.subr.bf16.mxu0 0
  %123 = vmatpush1.bf16.msra.mxu0 %v93
  %124 = vmatprep.subr.bf16.mxu0 0
  %125 = vmatpush1.bf16.msra.mxu0 %v92
  %126 = vmatprep.subr.bf16.mxu0 0
  %127 = vmatpush1.bf16.msra.mxu0 %v91
  %128 = vmatprep.subr.bf16.mxu0 0
  %129 = vmatpush2.bf16.msra.mxu0 0
  %130 = vmatprep.subr.bf16.mxu0 0
  %131 = vmatpush2.bf16.msra.mxu0 0
  %132 = vmatprep.subr.bf16.mxu0 0
  %133 = vmatpush2.bf16.msra.mxu0 0
  %134 = vmatprep.subr.bf16.mxu0 0
  %135 = vmatpush2.bf16.msra.mxu0 0
  %136 = vmatprep.subr.bf16.mxu0 0
  %137 = vmatpush2.bf16.msra.mxu0 0
  %138 = vmatprep.subr.bf16.mxu0 0
  %139 = vmatpush2.bf16.msra.mxu0 0
  %140 = vmatprep.subr.bf16.mxu0 0
  %141 = vmatpush2.bf16.msra.mxu0 0
  %142 = vmatprep.subr.bf16.mxu0 0
  %143 = vmatpush2.bf16.msra.mxu0 0
  %144 = vmatprep.mubr.bf16.mxu0 0
  %145 = vmatmul.mubr.bf16.gmra.mxu0 %v101
  %v146 = vpop.f32.mrf.mxu0
  %v147 = vadd.f32 0.0, %v146
  %v148 = vpop.f32.mrf.mxu0
  %v149 = vpop.f32.mrf.mxu0
  %v150 = vadd.f32 0.0, %v149
  %v151 = vpop.f32.mrf.mxu0
  %152 = vmatprep.mubr.bf16.mxu0 0
  %153 = vmatmul.mubr.bf16.gmra.mxu0 %v104
  %v154 = vpop.f32.mrf.mxu0
  %v155 = vadd.f32 0.0, %v154
  %v156 = vpop.f32.mrf.mxu0
  %v157 = vpop.f32.mrf.mxu0
  %v158 = vadd.f32 0.0, %v157
  %v159 = vpop.f32.mrf.mxu0
  %160 = vmatprep.mubr.bf16.mxu0 0
  %161 = vmatmul.mubr.bf16.gmra.mxu0 %v107
  %v162 = vpop.f32.mrf.mxu0
  %v163 = vadd.f32 0.0, %v162
  %v164 = vpop.f32.mrf.mxu0
  %v165 = vpop.f32.mrf.mxu0
  %v166 = vadd.f32 0.0, %v165
  %v167 = vpop.f32.mrf.mxu0
  %168 = vmatprep.mubr.bf16.mxu0 0
  %169 = vmatmul.mubr.bf16.gmra.mxu0 %v110
  %v170 = vpop.f32.mrf.mxu0
  %v171 = vadd.f32 0.0, %v170
  %v172 = vpop.f32.mrf.mxu0
  %v173 = vpop.f32.mrf.mxu0
  %v174 = vadd.f32 0.0, %v173
  %v175 = vpop.f32.mrf.mxu0
  %176 = vdwg.mxu0
  %v177 = vadd.f32 %v31, %v147
  %v178 = vadd.f32 %v32, %v150
  %v179 = vadd.f32 %v33, %v155
  %v180 = vadd.f32 %v34, %v158
  %v181 = vadd.f32 %v35, %v163
  %v182 = vadd.f32 %v36, %v166
  %v183 = vadd.f32 %v37, %v171
  %v184 = vadd.f32 %v38, %v174
  %vm185 = vcmask 261120
  %186 = vst.msk [vmem:[#allocation2] sm:$0xff] %vm185, %v177
  %187 = vst.msk [vmem:[#allocation2 + $0x8] sm:$0xff] %vm185, %v178
  %188 = vst.msk [vmem:[#allocation2 + $0x10] sm:$0xff] %vm185, %v179
  %189 = vst.msk [vmem:[#allocation2 + $0x18] sm:$0xff] %vm185, %v180
  %190 = vst.msk [vmem:[#allocation2 + $0x20] sm:$0xff] %vm185, %v181
  %191 = vst.msk [vmem:[#allocation2 + $0x28] sm:$0xff] %vm185, %v182
  %192 = vst.msk [vmem:[#allocation2 + $0x30] sm:$0xff] %vm185, %v183
  %193 = vst.msk [vmem:[#allocation2 + $0x38] sm:$0xff] %vm185, %v184
  // Predicated region
  $region22: #{gcn_hidden_layer.1} parent=0 // pred_check
    %p194 = pneg %p18
  $region23: #{gcn_hidden_layer.1} parent=0 // pred_check_branch
    %196 = sbr.rel (%p194) target = $region25
  $region24: #{gcn_hidden_layer.1} parent=0 // pred_region
    %v197 = vld [vmem:[#allocation2] sm:$0xff]
    %v198 = vld [vmem:[#allocation2 + $0x8] sm:$0xff]
    %v199 = vld [vmem:[#allocation2 + $0x10] sm:$0xff]
    %v200 = vld [vmem:[#allocation2 + $0x18] sm:$0xff]
    %v201 = vld [vmem:[#allocation2 + $0x20] sm:$0xff]
    %v202 = vld [vmem:[#allocation2 + $0x28] sm:$0xff]
    %v203 = vld [vmem:[#allocation2 + $0x30] sm:$0xff]
    %v204 = vld [vmem:[#allocation2 + $0x38] sm:$0xff]
    %v205 = vld [vmem:[%s2] sm:$0x1]
    %v207 = vlaneseq
    %v208 = vshrl.u32 %v207, 7
    %v209 = vsub.s32 0, %v208
    %v210 = vrot.slane %v205, %v209
    %v212 = vmul.f32 %v197, %v210
    %v213 = vmul.f32 %v198, %v210
    %v214 = vmul.f32 %v199, %v210
    %v215 = vmul.f32 %v200, %v210
    %v216 = vmul.f32 %v201, %v210
    %v217 = vmul.f32 %v202, %v210
    %v218 = vmul.f32 %v203, %v210
    %v219 = vmul.f32 %v204, %v210
    %v220 = vld [vmem:[%s3] sm:$0x1]
    %v222 = vlaneseq
    %v223 = vshrl.u32 %v222, 7
    %v224 = vsub.s32 0, %v223
    %v225 = vrot.slane %v220, %v224
    %v227 = vadd.f32 %v212, %v225
    %v228 = vadd.f32 %v213, %v225
    %v229 = vadd.f32 %v214, %v225
    %v230 = vadd.f32 %v215, %v225
    %v231 = vadd.f32 %v216, %v225
    %v232 = vadd.f32 %v217, %v225
    %v233 = vadd.f32 %v218, %v225
    %v234 = vadd.f32 %v219, %v225
    %v235 = vmax.f32 %v227, 0.0
    %v236 = vmax.f32 %v228, 0.0
    %v237 = vmax.f32 %v229, 0.0
    %v238 = vmax.f32 %v230, 0.0
    %v239 = vmax.f32 %v231, 0.0
    %v240 = vmax.f32 %v232, 0.0
    %v241 = vmax.f32 %v233, 0.0
    %v242 = vmax.f32 %v234, 0.0
    %243 = vst.msk [vmem:[%s4] sm:$0xff] %vm185, %v235
    %244 = vst.msk [vmem:[%s4 + $0x8] sm:$0xff] %vm185, %v236
    %245 = vst.msk [vmem:[%s4 + $0x10] sm:$0xff] %vm185, %v237
    %246 = vst.msk [vmem:[%s4 + $0x18] sm:$0xff] %vm185, %v238
    %247 = vst.msk [vmem:[%s4 + $0x20] sm:$0xff] %vm185, %v239
    %248 = vst.msk [vmem:[%s4 + $0x28] sm:$0xff] %vm185, %v240
    %249 = vst.msk [vmem:[%s4 + $0x30] sm:$0xff] %vm185, %v241
    %250 = vst.msk [vmem:[%s4 + $0x38] sm:$0xff] %vm185, %v242
  $region25: #{gcn_hidden_layer.1} parent=0 // pred_fallthru
    _
  // Predicated region
  $region26: #{gcn_hidden_layer.1} parent=0 // pred_check
    _
  $region27: #{gcn_hidden_layer.1} parent=0 // pred_check_branch
    %252 = sbr.rel (0) target = $region29
  $region28: #{gcn_hidden_layer.1} parent=0 // pred_region
    _
  $region29: #{gcn_hidden_layer.1} parent=0 // pred_fallthru
    _
  // Predicated region
  $region30: #{gcn_hidden_layer.1} parent=0 // pred_check
    _
  $region31: #{gcn_hidden_layer.1} parent=0 // pred_check_branch
    %254 = sbr.rel (0) target = $region33
  $region32: #{gcn_hidden_layer.1} parent=0 // pred_region
    _
  $region33: #{gcn_hidden_layer.1} parent=0 // pred_fallthru
    _

</llo_original>
